<compile_context>
chip_gen: v6e
topology: v6e:2x2x1
jax: 0.10.0
libtpu: 0.0.40
codegen_flags: <defaults>
</compile_context>

<pallas_src>
import jax
import jax.numpy as jnp
from jax.experimental import pallas as pl
from jax.experimental.pallas import tpu as pltpu

HID1 = 64
HID2 = 128
LANE = 128        # lane width (last-dim alignment)
TILE_ROUND = 16   # bf16-native sublane tile for batch rounding
NEG_BIAS = -1e30  # finite "minus infinity" for padded softmax lanes


def _round_up(x, m):
    return (x + m - 1) // m * m


def actor_kernel(obs_ref, w1_ref, b1_ref, w2_ref, b2_ref, w3_ref, b3_ref,
                 out_ref):
    # obs_ref: (TB, in_size) f32; weights bf16; biases f32 (1, F_PAD).
    x = obs_ref[...].astype(jnp.bfloat16)          # cast in VMEM, no HBM pass

    # fc_layer1 + tanh: f32 MXU accumulation, tanh on the bf16 value that
    # feeds the next matmul anyway (bf16 EUP on v6e/v7x; widened on v5e).
    a1 = jnp.dot(x, w1_ref[...], preferred_element_type=jnp.float32) \
        + b1_ref[...]
    h1 = jnp.tanh(a1.astype(jnp.bfloat16))

    # fc_layer2 + tanh
    a2 = jnp.dot(h1, w2_ref[...], preferred_element_type=jnp.float32) \
        + b2_ref[...]
    h2 = jnp.tanh(a2.astype(jnp.bfloat16))

    # fc_layer3 + softmax over the feature axis.  Padded output lanes carry a
    # large negative (finite) bias on top of exactly-zero weight columns, so
    # exp() underflows them to 0 and the denominator is exact.
    logits = jnp.dot(h2, w3_ref[...], preferred_element_type=jnp.float32) \
        + b3_ref[...]
    m = jnp.max(logits, axis=-1, keepdims=True)
    e = jnp.exp(logits - m)
    denom = jnp.sum(e, axis=-1, keepdims=True)
    out_ref[...] = (e / denom).astype(out_ref.dtype)   # exact normalization


def init_params(key, obsinput_size, output_size):
    """Deterministic init mimicking nn.Linear's U(-1/sqrt(fan_in), +...).

    Weights are stored as (in_features, out_features) == transpose of
    PyTorch's (out, in) layout, so the kernel computes x @ W + b.
    """
    ks = jax.random.split(key, 6)

    def linear(kw, kb, fan_in, fan_out):
        bound = 1.0 / jnp.sqrt(fan_in)
        w = jax.random.uniform(kw, (fan_in, fan_out), jnp.float32,
                               -bound, bound)
        b = jax.random.uniform(kb, (fan_out,), jnp.float32, -bound, bound)
        return w, b

    w1, b1 = linear(ks[0], ks[1], obsinput_size, HID1)
    w2, b2 = linear(ks[2], ks[3], HID1, HID2)
    w3, b3 = linear(ks[4], ks[5], HID2, output_size)
    return w1, b1, w2, b2, w3, b3


def prepare_params(w1, b1, w2, b2, w3, b3):
    """Pad feature (lane) dims to multiples of 128; cast weights to bf16.

    w1 keeps its real number of rows (the obs contraction dim) so the obs
    stream needs no lane padding.  Zero-padded weight rows/cols are exact for
    the matmuls; the padded columns of the last layer get a large negative
    bias so they vanish in the softmax (weights there are exactly zero, so no
    inf/NaN can appear).  Done once, outside the per-call path.
    """
    in_size, h1_size = w1.shape
    h2_size, out_size = w3.shape
    h1_pad = _round_up(h1_size, LANE)
    h2_pad = _round_up(h2_size, LANE)
    out_pad = _round_up(out_size, LANE)

    def pad2(a, r, c):
        return jnp.zeros((r, c), a.dtype).at[:a.shape[0], :a.shape[1]].set(a)

    w1p = pad2(w1, in_size, h1_pad).astype(jnp.bfloat16)   # K rows un-padded
    w2p = pad2(w2, h1_pad, h2_pad).astype(jnp.bfloat16)
    w3p = pad2(w3, h2_pad, out_pad).astype(jnp.bfloat16)
    b1p = pad2(b1.reshape(1, -1), 1, h1_pad)                          # f32
    b2p = pad2(b2.reshape(1, -1), 1, h2_pad)                          # f32
    b3p = jnp.full((1, out_pad), NEG_BIAS,
                   jnp.float32).at[0, :out_size].set(b3)              # f32
    return (w1p, b1p, w2p, b2p, w3p, b3p, out_size)


def _choose_tile(batch, max_tile):
    """Batch tile: as big as allowed, but >=2 grid steps for large batches
    (v7x megacore), rounded to the bf16-native 16-row sublane tile."""
    half = _round_up(max(-(-batch // 2), 1), TILE_ROUND)   # ceil(B/2) rounded
    return max(TILE_ROUND, min(max_tile, half))


def actor_forward(obs, packed, *, max_tile=1024):
    """obs: (B, obsinput_size) f32.  Returns (B, output_size) f32 softmax."""
    w1, b1, w2, b2, w3, b3, out_size = packed
    B, in_size = obs.shape
    out_pad = w3.shape[1]

    tb = _choose_tile(B, max_tile)
    b_pad = _round_up(B, tb)
    if b_pad != B:
        # Row pad only (no lane inflation, no dtype-change HBM pass).
        obs = jnp.pad(obs, ((0, b_pad - B), (0, 0)))

    const = lambda i: (0, 0)  # weights/biases: resident, never re-fetched

    # Advisory cost hint so XLA overlaps the surrounding slice/cast HLOs.
    flops = 2 * b_pad * (in_size * w1.shape[1]
                         + w2.shape[0] * w2.shape[1]
                         + w3.shape[0] * out_pad)
    transcendentals = b_pad * (w1.shape[1] + w2.shape[1] + out_pad)
    bytes_accessed = (b_pad * in_size * 4            # obs stream (f32)
                      + b_pad * out_pad * 2          # bf16 output writeback
                      + (w1.size + w2.size + w3.size) * 2
                      + (b1.size + b2.size + b3.size) * 4)

    out_p = pl.pallas_call(
        actor_kernel,
        out_shape=jax.ShapeDtypeStruct((b_pad, out_pad), jnp.bfloat16),
        grid=(b_pad // tb,),
        in_specs=[
            pl.BlockSpec((tb, in_size), lambda i: (i, 0)),   # obs tiles
            pl.BlockSpec(w1.shape, const),
            pl.BlockSpec(b1.shape, const),
            pl.BlockSpec(w2.shape, const),
            pl.BlockSpec(b2.shape, const),
            pl.BlockSpec(w3.shape, const),
            pl.BlockSpec(b3.shape, const),
        ],
        out_specs=pl.BlockSpec((tb, out_pad), lambda i: (i, 0)),
        compiler_params=pltpu.CompilerParams(
            dimension_semantics=("parallel",),
            vmem_limit_bytes=32 * 1024 * 1024,   # conservative for v7x
        ),
        cost_estimate=pl.CostEstimate(
            flops=int(flops),
            transcendentals=int(transcendentals),
            bytes_accessed=int(bytes_accessed)),
    )(obs, w1, b1, w2, b2, w3, b3)

    # Drop batch padding and padded (lane-dense) output columns.
    return out_p[:B, :out_size].astype(jnp.float32)


if __name__ == "__main__":
    key = jax.random.PRNGKey(0)
    k_obs, k_params = jax.random.split(key)

    batch = 2
    obsinput_size = 32
    output_size = 8

    obs = jax.random.normal(k_obs, (batch, obsinput_size), jnp.float32)
    raw = init_params(k_params, obsinput_size, output_size)
    packed = prepare_params(*raw)

    out = actor_forward(obs, packed)
    out = jax.block_until_ready(out)

    # References: (a) math-matched (bf16 operands / bf16 tanh / bf16 output),
    #             (b) pure f32 math.
    w1, b1, w2, b2, w3, b3 = raw
    xb = obs.astype(jnp.bfloat16)
    a1 = jnp.dot(xb, w1.astype(jnp.bfloat16),
                 preferred_element_type=jnp.float32) + b1
    h1 = jnp.tanh(a1.astype(jnp.bfloat16))
    a2 = jnp.dot(h1, w2.astype(jnp.bfloat16),
                 preferred_element_type=jnp.float32) + b2
    h2 = jnp.tanh(a2.astype(jnp.bfloat16))
    logits = jnp.dot(h2, w3.astype(jnp.bfloat16),
                     preferred_element_type=jnp.float32) + b3
    ref_matched = jax.nn.softmax(logits, axis=1).astype(
        jnp.bfloat16).astype(jnp.float32)

    h = jnp.tanh(obs @ w1 + b1)
    h = jnp.tanh(h @ w2 + b2)
    ref_f32 = jax.nn.softmax(h @ w3 + b3, axis=1)

    assert out.shape == (batch, output_size)
    assert bool(jnp.allclose(out, ref_matched, atol=5e-3, rtol=5e-3))
    assert bool(jnp.allclose(out, ref_f32, atol=5e-2, rtol=5e-2))
    # Rows sum to 1 up to bf16 output rounding (normalization itself is exact).
    assert bool(jnp.allclose(jnp.sum(out, axis=1), 1.0, atol=1e-2))

    print("KERNEL_OK")
</pallas_src>

<mosaic_0001>
module attributes {stable_mosaic.version = 11 : i64} {
  func.func @actor_kernel(%arg0: i32, %arg1: memref<16x32xf32, #tpu.memory_space<vmem>>, %arg2: memref<32x128xbf16, #tpu.memory_space<vmem>>, %arg3: memref<1x128xf32, #tpu.memory_space<vmem>>, %arg4: memref<128x128xbf16, #tpu.memory_space<vmem>>, %arg5: memref<1x128xf32, #tpu.memory_space<vmem>>, %arg6: memref<128x128xbf16, #tpu.memory_space<vmem>>, %arg7: memref<1x128xf32, #tpu.memory_space<vmem>>, %arg8: memref<16x128xbf16, #tpu.memory_space<vmem>>) attributes {dimension_semantics = [#tpu.dimension_semantics<parallel>], iteration_bounds = array<i64: 1>, scalar_prefetch = 0 : i64, scratch_operands = 0 : i64, tpu.core_type = #tpu.core_type<tc>, window_params = [{transform_indices = @transform_0, window_bounds = array<i64: 16, 32>}, {pipeline_mode = #tpu.pipeline_mode<synchronous>, transform_indices = @transform_1, window_bounds = array<i64: 32, 128>}, {pipeline_mode = #tpu.pipeline_mode<synchronous>, transform_indices = @transform_2, window_bounds = array<i64: 1, 128>}, {pipeline_mode = #tpu.pipeline_mode<synchronous>, transform_indices = @transform_3, window_bounds = array<i64: 128, 128>}, {pipeline_mode = #tpu.pipeline_mode<synchronous>, transform_indices = @transform_4, window_bounds = array<i64: 1, 128>}, {pipeline_mode = #tpu.pipeline_mode<synchronous>, transform_indices = @transform_5, window_bounds = array<i64: 128, 128>}, {pipeline_mode = #tpu.pipeline_mode<synchronous>, transform_indices = @transform_6, window_bounds = array<i64: 1, 128>}, {transform_indices = @transform_7, window_bounds = array<i64: 16, 128>}]} {
    %c0 = arith.constant 0 : index
    %c0_0 = arith.constant 0 : index
    %0 = vector.load %arg1[%c0, %c0_0] : memref<16x32xf32, #tpu.memory_space<vmem>>, vector<16x32xf32>
    %1 = arith.truncf %0 : vector<16x32xf32> to vector<16x32xbf16>
    %c0_1 = arith.constant 0 : index
    %c0_2 = arith.constant 0 : index
    %2 = vector.load %arg2[%c0_1, %c0_2] : memref<32x128xbf16, #tpu.memory_space<vmem>>, vector<32x128xbf16>
    %cst = arith.constant dense<0.000000e+00> : vector<16x128xf32>
    %3 = tpu.matmul %1, %2, %cst {dimension_numbers = #tpu.dot_dimension_numbers<[1], [0], [0], [1], [0, 0, 1, 1], [], []>} : vector<16x32xbf16>, vector<32x128xbf16>, vector<16x128xf32> -> vector<16x128xf32>
    %c0_3 = arith.constant 0 : index
    %c0_4 = arith.constant 0 : index
    %4 = vector.load %arg3[%c0_3, %c0_4] : memref<1x128xf32, #tpu.memory_space<vmem>>, vector<1x128xf32>
    %5 = vector.broadcast %4 : vector<1x128xf32> to vector<16x128xf32>
    %6 = arith.addf %3, %5 : vector<16x128xf32>
    %7 = arith.truncf %6 : vector<16x128xf32> to vector<16x128xbf16>
    %8 = math.tanh %7 : vector<16x128xbf16>
    %c0_5 = arith.constant 0 : index
    %c0_6 = arith.constant 0 : index
    %9 = vector.load %arg4[%c0_5, %c0_6] : memref<128x128xbf16, #tpu.memory_space<vmem>>, vector<128x128xbf16>
    %cst_7 = arith.constant dense<0.000000e+00> : vector<16x128xf32>
    %10 = tpu.matmul %8, %9, %cst_7 {dimension_numbers = #tpu.dot_dimension_numbers<[1], [0], [0], [1], [0, 0, 1, 1], [], []>} : vector<16x128xbf16>, vector<128x128xbf16>, vector<16x128xf32> -> vector<16x128xf32>
    %c0_8 = arith.constant 0 : index
    %c0_9 = arith.constant 0 : index
    %11 = vector.load %arg5[%c0_8, %c0_9] : memref<1x128xf32, #tpu.memory_space<vmem>>, vector<1x128xf32>
    %12 = vector.broadcast %11 : vector<1x128xf32> to vector<16x128xf32>
    %13 = arith.addf %10, %12 : vector<16x128xf32>
    %14 = arith.truncf %13 : vector<16x128xf32> to vector<16x128xbf16>
    %15 = math.tanh %14 : vector<16x128xbf16>
    %c0_10 = arith.constant 0 : index
    %c0_11 = arith.constant 0 : index
    %16 = vector.load %arg6[%c0_10, %c0_11] : memref<128x128xbf16, #tpu.memory_space<vmem>>, vector<128x128xbf16>
    %cst_12 = arith.constant dense<0.000000e+00> : vector<16x128xf32>
    %17 = tpu.matmul %15, %16, %cst_12 {dimension_numbers = #tpu.dot_dimension_numbers<[1], [0], [0], [1], [0, 0, 1, 1], [], []>} : vector<16x128xbf16>, vector<128x128xbf16>, vector<16x128xf32> -> vector<16x128xf32>
    %c0_13 = arith.constant 0 : index
    %c0_14 = arith.constant 0 : index
    %18 = vector.load %arg7[%c0_13, %c0_14] : memref<1x128xf32, #tpu.memory_space<vmem>>, vector<1x128xf32>
    %19 = vector.broadcast %18 : vector<1x128xf32> to vector<16x128xf32>
    %20 = arith.addf %17, %19 : vector<16x128xf32>
    %cst_15 = arith.constant dense<0xFF800000> : vector<16xf32>
    %21 = vector.multi_reduction <maximumf>, %20, %cst_15 [1] : vector<16x128xf32> to vector<16xf32>
    %22 = vector.shape_cast %21 : vector<16xf32> to vector<16x1xf32>
    %23 = vector.broadcast %22 : vector<16x1xf32> to vector<16x128xf32>
    %24 = arith.subf %20, %23 : vector<16x128xf32>
    %25 = math.exp %24 : vector<16x128xf32>
    %cst_16 = arith.constant dense<0.000000e+00> : vector<16xf32>
    %26 = vector.multi_reduction <add>, %25, %cst_16 [1] : vector<16x128xf32> to vector<16xf32>
    %27 = vector.shape_cast %26 : vector<16xf32> to vector<16x1xf32>
    %28 = vector.broadcast %27 : vector<16x1xf32> to vector<16x128xf32>
    %29 = arith.divf %25, %28 : vector<16x128xf32>
    %30 = arith.truncf %29 : vector<16x128xf32> to vector<16x128xbf16>
    %c0_17 = arith.constant 0 : index
    %c0_18 = arith.constant 0 : index
    %31 = vector.load %arg8[%c0_17, %c0_18] : memref<16x128xbf16, #tpu.memory_space<vmem>>, vector<16x128xbf16>
    tpu.vector_store %arg8[%c0_17, %c0_18], %30 {strides = array<i32>} : memref<16x128xbf16, #tpu.memory_space<vmem>>, vector<16x128xbf16>,
    return
  }
  func.func @transform_0(%arg0: i32) -> (i32, i32) {
    %c0_i32 = arith.constant 0 : i32
    %c0_i32_0 = arith.constant 0 : i32
    return %arg0, %c0_i32 : i32, i32
  }
  func.func @transform_1(%arg0: i32) -> (i32, i32) {
    %c0_i32 = arith.constant 0 : i32
    %c0_i32_0 = arith.constant 0 : i32
    %c0_i32_1 = arith.constant 0 : i32
    return %c0_i32, %c0_i32_0 : i32, i32
  }
  func.func @transform_2(%arg0: i32) -> (i32, i32) {
    %c0_i32 = arith.constant 0 : i32
    %c0_i32_0 = arith.constant 0 : i32
    %c0_i32_1 = arith.constant 0 : i32
    return %c0_i32, %c0_i32_0 : i32, i32
  }
  func.func @transform_3(%arg0: i32) -> (i32, i32) {
    %c0_i32 = arith.constant 0 : i32
    %c0_i32_0 = arith.constant 0 : i32
    %c0_i32_1 = arith.constant 0 : i32
    return %c0_i32, %c0_i32_0 : i32, i32
  }
  func.func @transform_4(%arg0: i32) -> (i32, i32) {
    %c0_i32 = arith.constant 0 : i32
    %c0_i32_0 = arith.constant 0 : i32
    %c0_i32_1 = arith.constant 0 : i32
    return %c0_i32, %c0_i32_0 : i32, i32
  }
  func.func @transform_5(%arg0: i32) -> (i32, i32) {
    %c0_i32 = arith.constant 0 : i32
    %c0_i32_0 = arith.constant 0 : i32
    %c0_i32_1 = arith.constant 0 : i32
    return %c0_i32, %c0_i32_0 : i32, i32
  }
  func.func @transform_6(%arg0: i32) -> (i32, i32) {
    %c0_i32 = arith.constant 0 : i32
    %c0_i32_0 = arith.constant 0 : i32
    %c0_i32_1 = arith.constant 0 : i32
    return %c0_i32, %c0_i32_0 : i32, i32
  }
  func.func @transform_7(%arg0: i32) -> (i32, i32) {
    %c0_i32 = arith.constant 0 : i32
    %c0_i32_0 = arith.constant 0 : i32
    return %arg0, %c0_i32 : i32, i32
  }
}

</mosaic_0001>

<llo_original>
// kernel: tpu_custom_call.1
$region0: #{tpu_custom_call.1}
  #allocation0 [shape = 'u32[]', space=smem, size = 0x4, offset = 0x4, fixed_abs, tag = 'smem constant byte address 0x4 - core index']
  #allocation1 [shape = 'u32[144,128]{1,0:T(1,128)}', space=vmem, size = 0x12000, scoped, tag = 'internal scratch']
  %s0 = inlined_call_operand.hbm [shape: f32[16,32], index: 0, kind: input, shape index: {}]
  %s1 = inlined_call_operand.hbm [shape: bf16[32,128], index: 1, kind: input, shape index: {}]
  %s2 = inlined_call_operand.vmem [shape: f32[1,128], index: 2, kind: input, shape index: {}]
  %s3 = inlined_call_operand.hbm [shape: bf16[128,128], index: 3, kind: input, shape index: {}]
  %s4 = inlined_call_operand.vmem [shape: f32[1,128], index: 4, kind: input, shape index: {}]
  %s5 = inlined_call_operand.hbm [shape: bf16[128,128], index: 5, kind: input, shape index: {}]
  %s6 = inlined_call_operand.vmem [shape: f32[1,128], index: 6, kind: input, shape index: {}]
  %s7 = inlined_call_operand.hbm [shape: bf16[16,128], index: 7, kind: output, shape index: {}]
  %s8 = sld [smem:[#allocation0]]
  $region54: #{tpu_custom_call.1} parent=0
    _
  %s10 = ssub.s32 1, %s8
  %s11 = scalar_select 0, %s10, %s8
  $region1: #{tpu_custom_call.1} parent=0
    #allocation2 [shape = 'u8[8192]{0}', space=vmem, size = 0x2000, scoped, tag = 'input window, operand 0, single buffered']
    #allocation3 [shape = 's32[1]{0}', space=sflag, size = 0x4, scoped, tag = 'scoped memory for tpu_custom_call.1']
    #allocation4 [shape = 's32[1]{0}', space=sflag, size = 0x4, scoped, tag = 'scoped memory for tpu_custom_call.1']
    #allocation5 [shape = 'u8[8192]{0}', space=vmem, size = 0x2000, scoped, tag = 'input window, operand 1, single buffered']
    #allocation6 [shape = 's32[1]{0}', space=sflag, size = 0x4, scoped, tag = 'scoped memory for tpu_custom_call.1']
    #allocation7 [shape = 'u8[32768]{0}', space=vmem, size = 0x8000, scoped, tag = 'input window, operand 3, single buffered']
    #allocation8 [shape = 'u8[32768]{0}', space=vmem, size = 0x8000, scoped, tag = 'input window, operand 5, single buffered']
    #allocation9 [shape = 's32[1]{0}', space=sflag, size = 0x4, scoped, tag = 'scoped memory for tpu_custom_call.1']
    #allocation10 [shape = 'u8[4096]{0}', space=vmem, size = 0x1000, scoped, tag = 'output window, operand 0, single buffered']
    %12 = vsyncpa [#allocation3], 0
    %13 = vsyncpa [#allocation6], 0
    %14 = vsyncpa [#allocation9], 0
    %15 = vsyncpa [#allocation4], 0
    // Predicated region
    $region2: #{tpu_custom_call.1} parent=1 // pred_check
      _
    $region3: #{tpu_custom_call.1} parent=1 // pred_check_branch
      %17 = sbr.rel (0) target = $region5
    $region4: #{tpu_custom_call.1} parent=1 // pred_region
      %s19 = ssub.s32 256, 256
      %20 = vsyncadd [#allocation3], %s19
      %s21 = sshll.u32 [#allocation2], 4
      %s22 = int_to_ptr.vmem [resolvable:$true] %s21
      %27 = dma.hbm_to_vmem [thread:$0]  %s0, 256, %s22, [#allocation3], 128, 128, 8
    $region5: #{tpu_custom_call.1} parent=1 // pred_fallthru
      _
    // Predicated region
    $region6: #{tpu_custom_call.1} parent=1 // pred_check
      _
    $region7: #{tpu_custom_call.1} parent=1 // pred_check_branch
      %29 = sbr.rel (0) target = $region9
    $region8: #{tpu_custom_call.1} parent=1 // pred_region
      %s31 = ssub.s32 256, 256
      %32 = vsyncadd [#allocation6], %s31
      %s33 = sshll.u32 [#allocation5], 4
      %s34 = int_to_ptr.vmem [resolvable:$true] %s33
      %39 = dma.hbm_to_vmem [thread:$0]  %s1, 256, %s34, [#allocation6], 64, 64, 4
    $region9: #{tpu_custom_call.1} parent=1 // pred_fallthru
      _
    // Predicated region
    $region10: #{tpu_custom_call.1} parent=1 // pred_check
      _
    $region11: #{tpu_custom_call.1} parent=1 // pred_check_branch
      %41 = sbr.rel (0) target = $region13
    $region12: #{tpu_custom_call.1} parent=1 // pred_region
      _
    $region13: #{tpu_custom_call.1} parent=1 // pred_fallthru
      _
    // Predicated region
    $region14: #{tpu_custom_call.1} parent=1 // pred_check
      _
    $region15: #{tpu_custom_call.1} parent=1 // pred_check_branch
      %43 = sbr.rel (0) target = $region17
    $region16: #{tpu_custom_call.1} parent=1 // pred_region
      %s45 = ssub.s32 1024, 1024
      %46 = vsyncadd [#allocation6], %s45
      %s47 = sshll.u32 [#allocation7], 4
      %s48 = int_to_ptr.vmem [resolvable:$true] %s47
      %53 = dma.hbm_to_vmem [thread:$0]  %s3, 1024, %s48, [#allocation6], 64, 64, 4
    $region17: #{tpu_custom_call.1} parent=1 // pred_fallthru
      _
    // Predicated region
    $region18: #{tpu_custom_call.1} parent=1 // pred_check
      _
    $region19: #{tpu_custom_call.1} parent=1 // pred_check_branch
      %55 = sbr.rel (0) target = $region21
    $region20: #{tpu_custom_call.1} parent=1 // pred_region
      _
    $region21: #{tpu_custom_call.1} parent=1 // pred_fallthru
      _
    // Predicated region
    $region22: #{tpu_custom_call.1} parent=1 // pred_check
      _
    $region23: #{tpu_custom_call.1} parent=1 // pred_check_branch
      %57 = sbr.rel (0) target = $region25
    $region24: #{tpu_custom_call.1} parent=1 // pred_region
      %s59 = ssub.s32 1024, 1024
      %60 = vsyncadd [#allocation9], %s59
      %s61 = sshll.u32 [#allocation8], 4
      %s62 = int_to_ptr.vmem [resolvable:$true] %s61
      %67 = dma.hbm_to_vmem [thread:$0]  %s5, 1024, %s62, [#allocation9], 64, 64, 4
    $region25: #{tpu_custom_call.1} parent=1 // pred_fallthru
      _
    // Predicated region
    $region26: #{tpu_custom_call.1} parent=1 // pred_check
      _
    $region27: #{tpu_custom_call.1} parent=1 // pred_check_branch
      %69 = sbr.rel (0) target = $region29
    $region28: #{tpu_custom_call.1} parent=1 // pred_region
      _
    $region29: #{tpu_custom_call.1} parent=1 // pred_fallthru
      _
    // Predicated region
    $region30: #{tpu_custom_call.1} parent=1 // pred_check
      _
    $region31: #{tpu_custom_call.1} parent=1 // pred_check_branch
      %71 = sbr.rel (0) target = $region33
    $region32: #{tpu_custom_call.1} parent=1 // pred_region
      %72 = dma.done [#allocation3], 256
    $region33: #{tpu_custom_call.1} parent=1 // pred_fallthru
      _
    // Predicated region
    $region34: #{tpu_custom_call.1} parent=1 // pred_check
      _
    $region35: #{tpu_custom_call.1} parent=1 // pred_check_branch
      %74 = sbr.rel (0) target = $region37
    $region36: #{tpu_custom_call.1} parent=1 // pred_region
      %75 = dma.done [#allocation6], 256
    $region37: #{tpu_custom_call.1} parent=1 // pred_fallthru
      _
    // Predicated region
    $region38: #{tpu_custom_call.1} parent=1 // pred_check
      _
    $region39: #{tpu_custom_call.1} parent=1 // pred_check_branch
      %77 = sbr.rel (0) target = $region41
    $region40: #{tpu_custom_call.1} parent=1 // pred_region
      %78 = dma.done [#allocation6], 1024
    $region41: #{tpu_custom_call.1} parent=1 // pred_fallthru
      _
    // Predicated region
    $region42: #{tpu_custom_call.1} parent=1 // pred_check
      _
    $region43: #{tpu_custom_call.1} parent=1 // pred_check_branch
      %80 = sbr.rel (0) target = $region45
    $region44: #{tpu_custom_call.1} parent=1 // pred_region
      %81 = dma.done [#allocation9], 1024
    $region45: #{tpu_custom_call.1} parent=1 // pred_fallthru
      _
    %v83 = vld [vmem:[#allocation2] sm:$0xff]
    %v84 = vld [vmem:[#allocation2 + $0x8] sm:$0xff]
    %v85 = vpack.c.bf16 %v84, %v83
    %v86 = vld [vmem:[#allocation5] sm:$0xf]
    %v87 = vld [vmem:[#allocation5 + $0x4] sm:$0xf]
    %v88 = vld [vmem:[#allocation5 + $0x8] sm:$0xf]
    %v89 = vld [vmem:[#allocation5 + $0xc] sm:$0xf]
    %v90 = vld [vmem:[%s2] sm:$0x1]
    %v92 = vlaneseq
    %v93 = vshrl.u32 %v92, 7
    %v94 = vsub.s32 0, %v93
    %v95 = vrot.slane %v90, %v94
    %v101 = vunpack.c.l.b16 %v86
    %v102 = vunpack.c.l.b16 %v87
    %v103 = vunpack.c.l.b16 %v88
    %v104 = vunpack.c.l.b16 %v89
    %v105 = vpack.c.b16 %v102, %v101
    %v106 = vpack.c.b16 %v104, %v103
    %vm109 = vcmask 261120
    %v111 = vsel %vm109, %v85, 0
    %113 = vmatprep.subr.bf16.mxu0 0
    %114 = vmatpush1.bf16.msra.mxu0 0
    %115 = vmatprep.subr.bf16.mxu0 0
    %116 = vmatpush1.bf16.msra.mxu0 0
    %117 = vmatprep.subr.bf16.mxu0 0
    %118 = vmatpush1.bf16.msra.mxu0 0
    %119 = vmatprep.subr.bf16.mxu0 0
    %120 = vmatpush1.bf16.msra.mxu0 0
    %121 = vmatprep.subr.bf16.mxu0 0
    %122 = vmatpush1.bf16.msra.mxu0 0
    %123 = vmatprep.subr.bf16.mxu0 0
    %124 = vmatpush1.bf16.msra.mxu0 0
    %125 = vmatprep.subr.bf16.mxu0 0
    %126 = vmatpush1.bf16.msra.mxu0 %v106
    %127 = vmatprep.subr.bf16.mxu0 0
    %128 = vmatpush1.bf16.msra.mxu0 %v105
    %129 = vmatprep.subr.bf16.mxu0 0
    %130 = vmatpush2.bf16.msra.mxu0 0
    %131 = vmatprep.subr.bf16.mxu0 0
    %132 = vmatpush2.bf16.msra.mxu0 0
    %133 = vmatprep.subr.bf16.mxu0 0
    %134 = vmatpush2.bf16.msra.mxu0 0
    %135 = vmatprep.subr.bf16.mxu0 0
    %136 = vmatpush2.bf16.msra.mxu0 0
    %137 = vmatprep.subr.bf16.mxu0 0
    %138 = vmatpush2.bf16.msra.mxu0 0
    %139 = vmatprep.subr.bf16.mxu0 0
    %140 = vmatpush2.bf16.msra.mxu0 0
    %141 = vmatprep.subr.bf16.mxu0 0
    %142 = vmatpush2.bf16.msra.mxu0 0
    %143 = vmatprep.subr.bf16.mxu0 0
    %144 = vmatpush2.bf16.msra.mxu0 0
    %145 = vmatprep.mubr.bf16.mxu0 0
    %146 = vmatmul.mubr.bf16.gmra.mxu0 %v111
    %v147 = vpop.f32.mrf.mxu0
    %v148 = vadd.f32 %v95, %v147
    %v149 = vpop.f32.mrf.mxu0
    %v150 = vpop.f32.mrf.mxu0
    %v151 = vadd.f32 %v95, %v150
    %v152 = vpop.f32.mrf.mxu0
    %153 = vdwg.mxu0
    %v154 = vpack.c.bf16 %v151, %v148
    %v155 = vtanh.bf16.pop %v154
    %v156 = vld [vmem:[#allocation7] sm:$0xf]
    %v157 = vld [vmem:[#allocation7 + $0x4] sm:$0xf]
    %v158 = vld [vmem:[#allocation7 + $0x8] sm:$0xf]
    %v159 = vld [vmem:[#allocation7 + $0xc] sm:$0xf]
    %v160 = vld [vmem:[#allocation7 + $0x10] sm:$0xf]
    %v161 = vld [vmem:[#allocation7 + $0x14] sm:$0xf]
    %v162 = vld [vmem:[#allocation7 + $0x18] sm:$0xf]
    %v163 = vld [vmem:[#allocation7 + $0x1c] sm:$0xf]
    %v164 = vld [vmem:[#allocation7 + $0x20] sm:$0xf]
    %v165 = vld [vmem:[#allocation7 + $0x24] sm:$0xf]
    %v166 = vld [vmem:[#allocation7 + $0x28] sm:$0xf]
    %v167 = vld [vmem:[#allocation7 + $0x2c] sm:$0xf]
    %v168 = vld [vmem:[#allocation7 + $0x30] sm:$0xf]
    %v169 = vld [vmem:[#allocation7 + $0x34] sm:$0xf]
    %v170 = vld [vmem:[#allocation7 + $0x38] sm:$0xf]
    %v171 = vld [vmem:[#allocation7 + $0x3c] sm:$0xf]
    %v172 = vld [vmem:[%s4] sm:$0x1]
    %v174 = vlaneseq
    %v175 = vshrl.u32 %v174, 7
    %v176 = vsub.s32 0, %v175
    %v177 = vrot.slane %v172, %v176
    %v195 = vunpack.c.l.b16 %v156
    %v196 = vunpack.c.l.b16 %v157
    %v197 = vunpack.c.l.b16 %v158
    %v198 = vunpack.c.l.b16 %v159
    %v199 = vunpack.c.l.b16 %v160
    %v200 = vunpack.c.l.b16 %v161
    %v201 = vunpack.c.l.b16 %v162
    %v202 = vunpack.c.l.b16 %v163
    %v203 = vunpack.c.l.b16 %v164
    %v204 = vunpack.c.l.b16 %v165
    %v205 = vunpack.c.l.b16 %v166
    %v206 = vunpack.c.l.b16 %v167
    %v207 = vunpack.c.l.b16 %v168
    %v208 = vunpack.c.l.b16 %v169
    %v209 = vunpack.c.l.b16 %v170
    %v210 = vunpack.c.l.b16 %v171
    %v211 = vpack.c.b16 %v196, %v195
    %v212 = vpack.c.b16 %v198, %v197
    %v213 = vpack.c.b16 %v200, %v199
    %v214 = vpack.c.b16 %v202, %v201
    %v215 = vpack.c.b16 %v204, %v203
    %v216 = vpack.c.b16 %v206, %v205
    %v217 = vpack.c.b16 %v208, %v207
    %v218 = vpack.c.b16 %v210, %v209
    %227 = vmatprep.subr.bf16.mxu0 0
    %228 = vmatpush1.bf16.msra.mxu0 %v218
    %229 = vmatprep.subr.bf16.mxu0 0
    %230 = vmatpush1.bf16.msra.mxu0 %v217
    %231 = vmatprep.subr.bf16.mxu0 0
    %232 = vmatpush1.bf16.msra.mxu0 %v216
    %233 = vmatprep.subr.bf16.mxu0 0
    %234 = vmatpush1.bf16.msra.mxu0 %v215
    %235 = vmatprep.subr.bf16.mxu0 0
    %236 = vmatpush1.bf16.msra.mxu0 %v214
    %237 = vmatprep.subr.bf16.mxu0 0
    %238 = vmatpush1.bf16.msra.mxu0 %v213
    %239 = vmatprep.subr.bf16.mxu0 0
    %240 = vmatpush1.bf16.msra.mxu0 %v212
    %241 = vmatprep.subr.bf16.mxu0 0
    %242 = vmatpush1.bf16.msra.mxu0 %v211
    %243 = vmatprep.subr.bf16.mxu0 0
    %244 = vmatpush2.bf16.msra.mxu0 0
    %245 = vmatprep.subr.bf16.mxu0 0
    %246 = vmatpush2.bf16.msra.mxu0 0
    %247 = vmatprep.subr.bf16.mxu0 0
    %248 = vmatpush2.bf16.msra.mxu0 0
    %249 = vmatprep.subr.bf16.mxu0 0
    %250 = vmatpush2.bf16.msra.mxu0 0
    %251 = vmatprep.subr.bf16.mxu0 0
    %252 = vmatpush2.bf16.msra.mxu0 0
    %253 = vmatprep.subr.bf16.mxu0 0
    %254 = vmatpush2.bf16.msra.mxu0 0
    %255 = vmatprep.subr.bf16.mxu0 0
    %256 = vmatpush2.bf16.msra.mxu0 0
    %257 = vmatprep.subr.bf16.mxu0 0
    %258 = vmatpush2.bf16.msra.mxu0 0
    %259 = vmatprep.mubr.bf16.mxu0 0
    %260 = vmatmul.mubr.bf16.gmra.mxu0 %v155
    %v261 = vpop.f32.mrf.mxu0
    %v262 = vadd.f32 %v177, %v261
    %v263 = vpop.f32.mrf.mxu0
    %v264 = vpop.f32.mrf.mxu0
    %v265 = vadd.f32 %v177, %v264
    %v266 = vpop.f32.mrf.mxu0
    %267 = vdwg.mxu0
    %v268 = vpack.c.bf16 %v265, %v262
    %v269 = vtanh.bf16.pop %v268
    %v270 = vld [vmem:[#allocation8] sm:$0xf]
    %v271 = vld [vmem:[#allocation8 + $0x4] sm:$0xf]
    %v272 = vld [vmem:[#allocation8 + $0x8] sm:$0xf]
    %v273 = vld [vmem:[#allocation8 + $0xc] sm:$0xf]
    %v274 = vld [vmem:[#allocation8 + $0x10] sm:$0xf]
    %v275 = vld [vmem:[#allocation8 + $0x14] sm:$0xf]
    %v276 = vld [vmem:[#allocation8 + $0x18] sm:$0xf]
    %v277 = vld [vmem:[#allocation8 + $0x1c] sm:$0xf]
    %v278 = vld [vmem:[#allocation8 + $0x20] sm:$0xf]
    %v279 = vld [vmem:[#allocation8 + $0x24] sm:$0xf]
    %v280 = vld [vmem:[#allocation8 + $0x28] sm:$0xf]
    %v281 = vld [vmem:[#allocation8 + $0x2c] sm:$0xf]
    %v282 = vld [vmem:[#allocation8 + $0x30] sm:$0xf]
    %v283 = vld [vmem:[#allocation8 + $0x34] sm:$0xf]
    %v284 = vld [vmem:[#allocation8 + $0x38] sm:$0xf]
    %v285 = vld [vmem:[#allocation8 + $0x3c] sm:$0xf]
    %v286 = vld [vmem:[%s6] sm:$0x1]
    %v288 = vlaneseq
    %v289 = vshrl.u32 %v288, 7
    %v290 = vsub.s32 0, %v289
    %v291 = vrot.slane %v286, %v290
    %v309 = vunpack.c.l.b16 %v270
    %v310 = vunpack.c.l.b16 %v271
    %v311 = vunpack.c.l.b16 %v272
    %v312 = vunpack.c.l.b16 %v273
    %v313 = vunpack.c.l.b16 %v274
    %v314 = vunpack.c.l.b16 %v275
    %v315 = vunpack.c.l.b16 %v276
    %v316 = vunpack.c.l.b16 %v277
    %v317 = vunpack.c.l.b16 %v278
    %v318 = vunpack.c.l.b16 %v279
    %v319 = vunpack.c.l.b16 %v280
    %v320 = vunpack.c.l.b16 %v281
    %v321 = vunpack.c.l.b16 %v282
    %v322 = vunpack.c.l.b16 %v283
    %v323 = vunpack.c.l.b16 %v284
    %v324 = vunpack.c.l.b16 %v285
    %v325 = vpack.c.b16 %v310, %v309
    %v326 = vpack.c.b16 %v312, %v311
    %v327 = vpack.c.b16 %v314, %v313
    %v328 = vpack.c.b16 %v316, %v315
    %v329 = vpack.c.b16 %v318, %v317
    %v330 = vpack.c.b16 %v320, %v319
    %v331 = vpack.c.b16 %v322, %v321
    %v332 = vpack.c.b16 %v324, %v323
    %341 = vmatprep.subr.bf16.mxu0 0
    %342 = vmatpush1.bf16.msra.mxu0 %v332
    %343 = vmatprep.subr.bf16.mxu0 0
    %344 = vmatpush1.bf16.msra.mxu0 %v331
    %345 = vmatprep.subr.bf16.mxu0 0
    %346 = vmatpush1.bf16.msra.mxu0 %v330
    %347 = vmatprep.subr.bf16.mxu0 0
    %348 = vmatpush1.bf16.msra.mxu0 %v329
    %349 = vmatprep.subr.bf16.mxu0 0
    %350 = vmatpush1.bf16.msra.mxu0 %v328
    %351 = vmatprep.subr.bf16.mxu0 0
    %352 = vmatpush1.bf16.msra.mxu0 %v327
    %353 = vmatprep.subr.bf16.mxu0 0
    %354 = vmatpush1.bf16.msra.mxu0 %v326
    %355 = vmatprep.subr.bf16.mxu0 0
    %356 = vmatpush1.bf16.msra.mxu0 %v325
    %357 = vmatprep.subr.bf16.mxu0 0
    %358 = vmatpush2.bf16.msra.mxu0 0
    %359 = vmatprep.subr.bf16.mxu0 0
    %360 = vmatpush2.bf16.msra.mxu0 0
    %361 = vmatprep.subr.bf16.mxu0 0
    %362 = vmatpush2.bf16.msra.mxu0 0
    %363 = vmatprep.subr.bf16.mxu0 0
    %364 = vmatpush2.bf16.msra.mxu0 0
    %365 = vmatprep.subr.bf16.mxu0 0
    %366 = vmatpush2.bf16.msra.mxu0 0
    %367 = vmatprep.subr.bf16.mxu0 0
    %368 = vmatpush2.bf16.msra.mxu0 0
    %369 = vmatprep.subr.bf16.mxu0 0
    %370 = vmatpush2.bf16.msra.mxu0 0
    %371 = vmatprep.subr.bf16.mxu0 0
    %372 = vmatpush2.bf16.msra.mxu0 0
    %373 = vmatprep.mubr.bf16.mxu0 0
    %374 = vmatmul.mubr.bf16.gmra.mxu0 %v269
    %v375 = vpop.f32.mrf.mxu0
    %v376 = vadd.f32 %v291, %v375
    %v377 = vpop.f32.mrf.mxu0
    %v378 = vpop.f32.mrf.mxu0
    %v379 = vadd.f32 %v291, %v378
    %v380 = vpop.f32.mrf.mxu0
    %381 = vdwg.mxu0
    %382 = vmax.xlane.f32.xlu0 %v376
    %v383 = vpop.xlane.xlu0 %382
    %384 = vmax.xlane.f32.xlu0 %v379
    %v385 = vpop.xlane.xlu0 %384
    %v386 = vsub.f32 %v376, %v383
    %v387 = vsub.f32 %v379, %v385
    %v388 = vmul.f32 %v386, 1.442695
    %v389 = vpow.pop %v388
    %v390 = vmul.f32 %v387, 1.442695
    %v391 = vpow.pop %v390
    %392 = vadd.xlane.f32.xlu0 %v389
    %v393 = vpop.xlane.xlu0 %392
    %394 = vadd.xlane.f32.xlu0 %v391
    %v395 = vpop.xlane.xlu0 %394
    %v396 = vrcp.pop %v393
    %v397 = vmul.f32 %v389, %v396
    %v398 = vrcp.pop %v395
    %v399 = vmul.f32 %v391, %v398
    %v400 = vpack.c.bf16 %v399, %v397
    %v402 = vunpack.c.l.b16 %v400
    %v403 = vunpack.c.h.b16 %v400
    %v404 = vpack.c.b16 %v402, %v402
    %v405 = vpack.c.b16 %v403, %v403
    %408 = vst [vmem:[#allocation10] sm:$0xf] %v404
    %409 = vst [vmem:[#allocation10 + $0x4] sm:$0xf] %v405
    // Predicated region
    $region46: #{tpu_custom_call.1} parent=1 // pred_check
      _
    $region47: #{tpu_custom_call.1} parent=1 // pred_check_branch
      %411 = sbr.rel (0) target = $region49
    $region48: #{tpu_custom_call.1} parent=1 // pred_region
      %s413 = ssub.s32 128, 128
      %414 = vsyncadd [#allocation4], %s413
      %s415 = sshll.u32 [#allocation10], 4
      %s416 = int_to_ptr.vmem [resolvable:$true] %s415
      %421 = dma.vmem_to_hbm [thread:$0]  %s416, 128, %s7, [#allocation4], 64, 64, 4
    $region49: #{tpu_custom_call.1} parent=1 // pred_fallthru
      _
    // Predicated region
    $region50: #{tpu_custom_call.1} parent=1 // pred_check
      _
    $region51: #{tpu_custom_call.1} parent=1 // pred_check_branch
      %423 = sbr.rel (0) target = $region53
    $region52: #{tpu_custom_call.1} parent=1 // pred_region
      %424 = dma.done [#allocation4], 128
    $region53: #{tpu_custom_call.1} parent=1 // pred_fallthru
      _
    %425 = vsyncpa [#allocation3], 1
    %426 = vsyncpa [#allocation6], 1
    %427 = vsyncpa [#allocation9], 1
    %428 = vsyncpa [#allocation4], 1

</llo_original>
